<compile_context>
chip_gen: v7x
topology: tpu7x:2x2x1
jax: 0.10.0
libtpu: 0.0.40
codegen_flags: <defaults>
</compile_context>

<pallas_src>
import functools

import jax
import jax.numpy as jnp
import numpy as np
from jax.experimental import pallas as pl
from jax.experimental.pallas import tpu as pltpu

NEG = -1e30          # finite stand-in for -inf in log space
BLOCK_B = 8          # samples per grid step (fills the 8 f32 sublanes)


def _round_up(x, m):
    return (x + m - 1) // m * m


def _focal_ctc_kernel(blkmax_ref,   # scalar prefetch (SMEM): (nblocks,) i32 max input len per block
                      emit_ref,     # (T, B, L) f32 gathered emission log-probs (time-major)
                      aux_ref,      # (3, B, L) f32 rows: [skip_add, fin_add, input_len]
                      out_ref,      # (B, 1)    f32 per-sample focal loss
                      *, gamma):
    B = emit_ref.shape[1]
    L = emit_ref.shape[2]
    neg = jnp.float32(NEG)

    skip_add = aux_ref[0]                 # (B, L) additive mask for the l-2 skip transition
    fin_add = aux_ref[1]                  # (B, L) additive mask selecting final positions
    len_row = aux_ref[2]                  # (B, L) per-sample input length broadcast over lanes

    l_iota = jax.lax.broadcasted_iota(jnp.int32, (B, L), 1)
    lane_ge1 = l_iota >= 1                # hoisted mask for the alpha[l-1] shift

    # t = 0 init: probability mass only at extended positions 0 and 1.
    alpha0 = jnp.where(l_iota < 2, emit_ref[0], neg)

    n_t = blkmax_ref[pl.program_id(0)]    # max input length within this block

    def body(t, alpha):
        e_t = emit_ref[t]                                           # (B, L)
        # alpha[l-1]: XLU lane rotate + kill the wrapped lane 0
        a1 = jnp.where(lane_ge1, pltpu.roll(alpha, 1, 1), neg)
        # alpha[l-2] (skip transition): lanes 0/1 and forbidden skips killed by skip_add
        a2 = pltpu.roll(alpha, 2, 1) + skip_add
        m = jnp.maximum(alpha, jnp.maximum(a1, a2))
        s = jnp.exp(alpha - m) + jnp.exp(a1 - m) + jnp.exp(a2 - m)
        cand = m + jnp.log(s) + e_t
        # per-sample freeze once t >= that sample's input length
        return jnp.where(t.astype(jnp.float32) < len_row, cand, alpha)

    alpha = jax.lax.fori_loop(1, n_t, body, alpha0)

    # final log-likelihood over the last two valid extended positions
    fa = alpha + fin_add
    m = jnp.max(fa, axis=1, keepdims=True)                          # (B, 1)
    loglik = m + jnp.log(jnp.sum(jnp.exp(fa - m), axis=1, keepdims=True))
    loss = -loglik                                                  # CTC NLL, (B, 1)

    # focal re-weighting (gamma static; gamma==2 avoids pow through exp/log)
    pt = jnp.exp(-loss)
    d = jnp.maximum(1.0 - pt, 0.0)
    if gamma == 2.0:
        fw = d * d
    elif gamma == 1.0:
        fw = d
    else:
        fw = d ** gamma
    out_ref[...] = fw * loss


def _focal_ctc_per_sample(log_probs, targets, input_lengths, target_lengths,
                          blank, gamma):
    T, N, C = log_probs.shape
    S = targets.shape[1]
    L = 2 * S + 1
    B = BLOCK_B
    n_pad = _round_up(max(N, B), B)
    nblocks = n_pad // B
    l_pad = _round_up(max(L, 128), 128)

    lp = log_probs.astype(jnp.float32)                              # (T, N, C)
    lp = jnp.pad(lp, ((0, 0), (0, n_pad - N), (0, 0)))              # benign zero rows

    # blank-interleaved extended targets, padded with blanks
    tgt = jnp.clip(targets.astype(jnp.int32), 0, C - 1)             # (N, S)
    ext = jnp.full((n_pad, l_pad), blank, jnp.int32)
    ext = ext.at[:N, 1:2 * S + 1:2].set(tgt)

    # emission gather hoisted out of the kernel: emit[t, n, l] = lp[t, n, ext[n, l]]
    emit = jnp.take_along_axis(
        lp, jnp.broadcast_to(ext[None, :, :], (T, n_pad, l_pad)), axis=2)

    # additive skip-transition mask: forbid l < 2, blank targets, repeated labels
    l_idx = jnp.arange(l_pad, dtype=jnp.int32)[None, :]
    ext_m2 = jnp.concatenate(
        [jnp.full((n_pad, 2), blank, jnp.int32), ext[:, :l_pad - 2]], axis=1)
    skip_ok = (l_idx >= 2) & (ext != blank) & (ext != ext_m2)
    skip_add = jnp.where(skip_ok, 0.0, NEG).astype(jnp.float32)

    # additive final-position mask at extended positions 2*tl and 2*tl-1
    tl = jnp.zeros((n_pad,), jnp.int32).at[:N].set(
        target_lengths.astype(jnp.int32))[:, None]
    fin_ok = (l_idx == 2 * tl) | (l_idx == 2 * tl - 1)
    fin_add = jnp.where(fin_ok, 0.0, NEG).astype(jnp.float32)

    # per-sample input lengths (clamped to [1, T]); padded samples get length 1
    ilen = jnp.ones((n_pad,), jnp.int32).at[:N].set(
        jnp.clip(input_lengths.astype(jnp.int32), 1, T))
    len_row = jnp.broadcast_to(ilen.astype(jnp.float32)[:, None], (n_pad, l_pad))

    # pack the three per-sample rows into ONE array -> one DMA per grid step
    aux = jnp.stack([skip_add, fin_add, len_row], axis=0)           # (3, n_pad, l_pad)
    blk_max = jnp.max(ilen.reshape(nblocks, B), axis=1).astype(jnp.int32)

    # VMEM budget from actual (double-buffered) block sizes, capped for v7x
    emit_blk = T * B * l_pad * 4
    aux_blk = 3 * B * l_pad * 4
    out_blk = B * 128 * 4
    vmem_limit = int(min(max(2 * (emit_blk + aux_blk + out_blk) + (2 << 20),
                             8 << 20), 64 << 20))

    grid_spec = pltpu.PrefetchScalarGridSpec(
        num_scalar_prefetch=1,
        grid=(nblocks,),
        in_specs=[
            pl.BlockSpec((T, B, l_pad), lambda b, blkmax: (0, b, 0)),
            pl.BlockSpec((3, B, l_pad), lambda b, blkmax: (0, b, 0)),
        ],
        out_specs=pl.BlockSpec((B, 1), lambda b, blkmax: (b, 0)),
    )

    focal = pl.pallas_call(
        functools.partial(_focal_ctc_kernel, gamma=gamma),
        out_shape=jax.ShapeDtypeStruct((n_pad, 1), jnp.float32),
        grid_spec=grid_spec,
        compiler_params=pltpu.CompilerParams(
            dimension_semantics=("parallel",),
            vmem_limit_bytes=vmem_limit),
    )(blk_max, emit, aux)
    return focal.reshape(n_pad)[:N]


@functools.partial(jax.jit, static_argnames=("blank", "gamma", "reduction"))
def focal_ctc_loss(log_probs, targets, input_lengths, target_lengths,
                   blank=0, gamma=2.0, reduction="mean"):
    """log_probs: (T, N, C) already log-softmaxed; targets: (N, S) int labels."""
    per_sample = _focal_ctc_per_sample(log_probs, targets, input_lengths,
                                       target_lengths, blank, gamma)
    if reduction == "mean":
        return jnp.mean(per_sample)
    if reduction == "sum":
        return jnp.sum(per_sample)
    return per_sample


# ----------------- pure numpy reference (mirrors PyTorch semantics) -----------------
def _np_logsumexp(vals):
    vals = np.asarray(vals, np.float64)
    m = vals.max()
    if not np.isfinite(m):
        return m
    return m + np.log(np.exp(vals - m).sum())


def _ref_focal_ctc(log_probs, targets, input_lengths, target_lengths,
                   blank=0, gamma=2.0):
    lp = np.asarray(log_probs, np.float64)
    T, N, C = lp.shape
    losses = np.zeros(N, np.float64)
    for n in range(N):
        S = int(target_lengths[n])
        Tn = int(input_lengths[n])
        ext = [blank]
        for k in range(S):
            ext += [int(targets[n, k]), blank]
        L = len(ext)
        alpha = np.full(L, -np.inf)
        alpha[0] = lp[0, n, ext[0]]
        if L > 1:
            alpha[1] = lp[0, n, ext[1]]
        for t in range(1, Tn):
            new = np.full(L, -np.inf)
            for l in range(L):
                terms = [alpha[l]]
                if l >= 1:
                    terms.append(alpha[l - 1])
                if l >= 2 and ext[l] != blank and ext[l] != ext[l - 2]:
                    terms.append(alpha[l - 2])
                new[l] = _np_logsumexp(terms) + lp[t, n, ext[l]]
            alpha = new
        tail = [alpha[L - 1]] + ([alpha[L - 2]] if L > 1 else [])
        losses[n] = -_np_logsumexp(tail)
    pt = np.exp(-losses)
    return ((1.0 - pt) ** gamma) * losses


if __name__ == "__main__":
    key = jax.random.PRNGKey(0)
    k1, k2 = jax.random.split(key)

    # time steps, batch, classes (class 0 = blank), max target length
    T, N, C, S = 16, 16, 8, 5
    log_probs = jax.nn.log_softmax(
        jax.random.normal(k1, (T, N, C), jnp.float32), axis=-1)
    targets = jax.random.randint(k2, (N, S), 1, C)          # labels in [1, C-1]
    target_lengths = jnp.array([5, 3, 4, 2, 5, 1, 4, 3, 5, 2, 3, 4, 1, 5, 2, 3],
                               jnp.int32)
    input_lengths = jnp.array([16, 12, 14, 11, 16, 13, 15, 12,
                               16, 11, 14, 13, 12, 16, 11, 15], jnp.int32)

    per_sample = focal_ctc_loss(log_probs, targets, input_lengths,
                                target_lengths, reduction="none")
    mean_loss = focal_ctc_loss(log_probs, targets, input_lengths,
                               target_lengths)               # default 'mean'
    per_sample = jax.block_until_ready(per_sample)
    mean_loss = jax.block_until_ready(mean_loss)

    ref = _ref_focal_ctc(np.asarray(log_probs), np.asarray(targets),
                         np.asarray(input_lengths), np.asarray(target_lengths))
    assert per_sample.shape == (N,), per_sample.shape
    assert np.allclose(np.asarray(per_sample), ref, rtol=1e-3, atol=1e-3), \
        (np.asarray(per_sample), ref)
    assert np.allclose(float(mean_loss), float(ref.mean()), rtol=1e-3, atol=1e-3), \
        (float(mean_loss), float(ref.mean()))

    print("KERNEL_OK")
</pallas_src>

<mosaic_0001>
module attributes {stable_mosaic.version = 11 : i64} {
  func.func @_focal_ctc_kernel(%arg0: i32, %arg1: memref<2xi32, #tpu.memory_space<smem>>, %arg2: memref<16x8x128xf32, #tpu.memory_space<vmem>>, %arg3: memref<3x8x128xf32, #tpu.memory_space<vmem>>, %arg4: memref<8x1xf32, #tpu.memory_space<vmem>>) attributes {dimension_semantics = [#tpu.dimension_semantics<parallel>], iteration_bounds = array<i64: 2>, scalar_prefetch = 1 : i64, scratch_operands = 0 : i64, tpu.core_type = #tpu.core_type<tc>, window_params = [{transform_indices = @transform_0, window_bounds = array<i64: 16, 8, 128>}, {transform_indices = @transform_1, window_bounds = array<i64: 3, 8, 128>}, {transform_indices = @transform_2, window_bounds = array<i64: 8, 1>}]} {
    %c0 = arith.constant 0 : index
    %c0_0 = arith.constant 0 : index
    %c0_1 = arith.constant 0 : index
    %0 = vector.load %arg3[%c0, %c0_0, %c0_1] : memref<3x8x128xf32, #tpu.memory_space<vmem>>, vector<1x8x128xf32>
    %1 = vector.shape_cast %0 : vector<1x8x128xf32> to vector<8x128xf32>
    %c1 = arith.constant 1 : index
    %c0_2 = arith.constant 0 : index
    %c0_3 = arith.constant 0 : index
    %2 = vector.load %arg3[%c1, %c0_2, %c0_3] : memref<3x8x128xf32, #tpu.memory_space<vmem>>, vector<1x8x128xf32>
    %3 = vector.shape_cast %2 : vector<1x8x128xf32> to vector<8x128xf32>
    %c2 = arith.constant 2 : index
    %c0_4 = arith.constant 0 : index
    %c0_5 = arith.constant 0 : index
    %4 = vector.load %arg3[%c2, %c0_4, %c0_5] : memref<3x8x128xf32, #tpu.memory_space<vmem>>, vector<1x8x128xf32>
    %5 = vector.shape_cast %4 : vector<1x8x128xf32> to vector<8x128xf32>
    %6 = tpu.iota {dimensions = array<i32: 1>} : vector<8x128xi32>
    %c1_i32 = arith.constant 1 : i32
    %7 = vector.broadcast %c1_i32 : i32 to vector<8x128xi32>
    %8 = arith.cmpi sge, %6, %7 : vector<8x128xi32>
    %c2_i32 = arith.constant 2 : i32
    %9 = vector.broadcast %c2_i32 : i32 to vector<8x128xi32>
    %10 = arith.cmpi slt, %6, %9 : vector<8x128xi32>
    %c0_6 = arith.constant 0 : index
    %c0_7 = arith.constant 0 : index
    %c0_8 = arith.constant 0 : index
    %11 = vector.load %arg2[%c0_6, %c0_7, %c0_8] : memref<16x8x128xf32, #tpu.memory_space<vmem>>, vector<1x8x128xf32>
    %12 = vector.shape_cast %11 : vector<1x8x128xf32> to vector<8x128xf32>
    %cst = arith.constant -1.000000e+30 : f32
    %13 = vector.broadcast %cst : f32 to vector<8x128xf32>
    %14 = arith.select %10, %12, %13 : vector<8x128xi1>, vector<8x128xf32>
    %15 = arith.index_cast %arg0 : i32 to index
    %16 = memref.load %arg1[%15] : memref<2xi32, #tpu.memory_space<smem>>
    %cst_9 = arith.constant -1.000000e+30 : f32
    %c1_i32_10 = arith.constant 1 : i32
    %17 = arith.subi %16, %c1_i32_10 : i32
    %18 = arith.addi %c1_i32_10, %17 : i32
    %c1_i32_11 = arith.constant 1 : i32
    %19 = scf.for %arg5 = %c1_i32_10 to %18 step %c1_i32_11 iter_args(%arg6 = %14) -> (vector<8x128xf32>)  : i32 {
      %42 = arith.index_cast %arg5 : i32 to index
      %c0_20 = arith.constant 0 : index
      %c0_21 = arith.constant 0 : index
      %43 = vector.load %arg2[%42, %c0_20, %c0_21] : memref<16x8x128xf32, #tpu.memory_space<vmem>>, vector<1x8x128xf32>
      %44 = vector.shape_cast %43 : vector<1x8x128xf32> to vector<8x128xf32>
      %c1_i32_22 = arith.constant 1 : i32
      %45 = tpu.dynamic_rotate %arg6 by %c1_i32_22 dim 1 : vector<8x128xf32>, i32 -> vector<8x128xf32>
      %46 = vector.broadcast %cst_9 : f32 to vector<8x128xf32>
      %47 = arith.select %8, %45, %46 : vector<8x128xi1>, vector<8x128xf32>
      %c2_i32_23 = arith.constant 2 : i32
      %48 = tpu.dynamic_rotate %arg6 by %c2_i32_23 dim 1 : vector<8x128xf32>, i32 -> vector<8x128xf32>
      %49 = arith.addf %48, %1 : vector<8x128xf32>
      %50 = arith.maximumf %47, %49 : vector<8x128xf32>
      %51 = arith.maximumf %arg6, %50 : vector<8x128xf32>
      %52 = arith.subf %arg6, %51 : vector<8x128xf32>
      %53 = math.exp %52 : vector<8x128xf32>
      %54 = arith.subf %47, %51 : vector<8x128xf32>
      %55 = math.exp %54 : vector<8x128xf32>
      %56 = arith.addf %53, %55 : vector<8x128xf32>
      %57 = arith.subf %49, %51 : vector<8x128xf32>
      %58 = math.exp %57 : vector<8x128xf32>
      %59 = arith.addf %56, %58 : vector<8x128xf32>
      %60 = math.log %59 : vector<8x128xf32>
      %61 = arith.addf %51, %60 : vector<8x128xf32>
      %62 = arith.addf %61, %44 : vector<8x128xf32>
      %63 = arith.sitofp %arg5 : i32 to f32
      %64 = vector.broadcast %63 : f32 to vector<8x128xf32>
      %65 = arith.cmpf olt, %64, %5 : vector<8x128xf32>
      %66 = arith.select %65, %62, %arg6 : vector<8x128xi1>, vector<8x128xf32>
      scf.yield %66 : vector<8x128xf32>
    }
    %20 = arith.addf %19, %3 : vector<8x128xf32>
    %cst_12 = arith.constant dense<0xFF800000> : vector<8xf32>
    %21 = vector.multi_reduction <maximumf>, %20, %cst_12 [1] : vector<8x128xf32> to vector<8xf32>
    %22 = vector.shape_cast %21 : vector<8xf32> to vector<8x1xf32>
    %23 = vector.broadcast %22 : vector<8x1xf32> to vector<8x128xf32>
    %24 = arith.subf %20, %23 : vector<8x128xf32>
    %25 = math.exp %24 : vector<8x128xf32>
    %cst_13 = arith.constant dense<0.000000e+00> : vector<8xf32>
    %26 = vector.multi_reduction <add>, %25, %cst_13 [1] : vector<8x128xf32> to vector<8xf32>
    %27 = vector.shape_cast %26 : vector<8xf32> to vector<8x1xf32>
    %28 = math.log %27 : vector<8x1xf32>
    %29 = arith.addf %22, %28 : vector<8x1xf32>
    %cst_14 = arith.constant 0.000000e+00 : f32
    %30 = vector.broadcast %cst_14 : f32 to vector<8x1xf32>
    %31 = arith.subf %30, %29 : vector<8x1xf32>
    %cst_15 = arith.constant 0.000000e+00 : f32
    %32 = vector.broadcast %cst_15 : f32 to vector<8x1xf32>
    %33 = arith.subf %32, %31 : vector<8x1xf32>
    %34 = math.exp %33 : vector<8x1xf32>
    %cst_16 = arith.constant 1.000000e+00 : f32
    %35 = vector.broadcast %cst_16 : f32 to vector<8x1xf32>
    %36 = arith.subf %35, %34 : vector<8x1xf32>
    %cst_17 = arith.constant 0.000000e+00 : f32
    %37 = vector.broadcast %cst_17 : f32 to vector<8x1xf32>
    %38 = arith.maximumf %36, %37 : vector<8x1xf32>
    %39 = arith.mulf %38, %38 : vector<8x1xf32>
    %40 = arith.mulf %39, %31 : vector<8x1xf32>
    %c0_18 = arith.constant 0 : index
    %c0_19 = arith.constant 0 : index
    %41 = vector.load %arg4[%c0_18, %c0_19] : memref<8x1xf32, #tpu.memory_space<vmem>>, vector<8x1xf32>
    tpu.vector_store %arg4[%c0_18, %c0_19], %40 {strides = array<i32>} : memref<8x1xf32, #tpu.memory_space<vmem>>, vector<8x1xf32>,
    return
  }
  func.func @transform_0(%arg0: i32, %arg1: memref<2xi32, #tpu.memory_space<smem>>) -> (i32, i32, i32) {
    %c0_i32 = arith.constant 0 : i32
    %c0_i32_0 = arith.constant 0 : i32
    %c0_i32_1 = arith.constant 0 : i32
    return %c0_i32, %arg0, %c0_i32_0 : i32, i32, i32
  }
  func.func @transform_1(%arg0: i32, %arg1: memref<2xi32, #tpu.memory_space<smem>>) -> (i32, i32, i32) {
    %c0_i32 = arith.constant 0 : i32
    %c0_i32_0 = arith.constant 0 : i32
    %c0_i32_1 = arith.constant 0 : i32
    return %c0_i32, %arg0, %c0_i32_0 : i32, i32, i32
  }
  func.func @transform_2(%arg0: i32, %arg1: memref<2xi32, #tpu.memory_space<smem>>) -> (i32, i32) {
    %c0_i32 = arith.constant 0 : i32
    %c0_i32_0 = arith.constant 0 : i32
    return %arg0, %c0_i32 : i32, i32
  }
}

</mosaic_0001>

<llo_original>
// kernel: focal_ctc_loss.1
$region0: #{focal_ctc_loss.1}
  #allocation0 [shape = 'u32[]', space=smem, size = 0x4, offset = 0x4, fixed_abs, tag = 'smem constant byte address 0x4 - core index']
  #allocation1 [shape = 'u32[144,128]{1,0:T(1,128)}', space=vmem, size = 0x12000, scoped, tag = 'internal scratch']
  #allocation2 [shape = 's32[1]{0}', space=sflag, size = 0x4, scoped, tag = 'scoped memory for focal_ctc_loss.1']
  #allocation3 [shape = 'u8[512]{0}', space=smem, size = 0x200, scoped, tag = 'prefetched SMEM operand 0']
  %s0 = inlined_call_operand.vmem [shape: s32[2], index: 0, kind: input, shape index: {}]
  %s1 = inlined_call_operand.vmem [shape: f32[16,16,128], index: 1, kind: input, shape index: {}]
  %s2 = inlined_call_operand.vmem [shape: f32[3,16,128], index: 2, kind: input, shape index: {}]
  %s3 = inlined_call_operand.vmem [shape: f32[16,1], index: 3, kind: output, shape index: {}]
  %s4 = sld [smem:[#allocation0]]
  $region124: #{focal_ctc_loss.1} parent=0
    _
  %s6 = ssub.s32 1, %s4
  %s7 = scalar_select 0, %s6, %s4
  %s8 = sshll.u32 %s0, 4
  %s9 = int_to_ptr.vmem [resolvable:$true] %s8
  %11 = dma.vmem_to_smem %s9, 16, [#allocation3], [#allocation2]
  %12 = dma.done [#allocation2], 16
  %13 = sfence
  $region1: #{focal_ctc_loss.1} parent=0
    #allocation4 [shape = 'u8[131072]{0}', space=vmem, size = 0x20000, scoped, tag = 'input window, operand 1']
    #allocation5 [shape = 'u8[24576]{0}', space=vmem, size = 0x6000, scoped, tag = 'input window, operand 2']
    loop: start=0, step=1, limit=4
    $region2: #{focal_ctc_loss.1} parent=1 // loop_pre_header
      _
    $region3: #{focal_ctc_loss.1} parent=1 // loop_header
      %s15 = sphi 0, %s19
      %p16 = scmp.ge.s32.totalorder %s15, 4
      %s25 = sphi 0, %s27
      %s28 = sphi 0, %s25
      %s29 = sphi 0, %s28
      %s45 = sphi 0, %s29
      %s51 = sphi 0, %s53
      %s54 = sphi 0, %s51
      %s55 = sphi 0, %s54
      %s71 = sphi 0, %s55
      %s77 = sphi 0, %s79
      %s80 = sphi 0, %s77
      %s81 = sphi 0, %s80
      %s97 = sphi 0, %s81
    $region4: #{focal_ctc_loss.1} parent=1 // loop_header_branch
      %18 = sbr.rel (%p16) target = $region8
    $region5: #{focal_ctc_loss.1} parent=1 // loop_body
      %s20 = ssub.s32 %s15, 1
      %s21 = ssub.s32 %s15, 2
      %s22 = sadd.s32 %s15, 1
      %s23 = ssub.s32 %s15, %s22
      %p24 = scmp.eq.s32.totalorder %s23, 0
      %s26 = sadd.s32 %s25, 1
      %s27 = scalar_select %p24, %s25, %s26
      %p30 = pneg %p24
      %p31 = scmp.eq.s32.totalorder %s15, 1
      %p32 = por %p30, %p31
      %p33 = scmp.ne.s32.totalorder %s25, %s28
      %p34 = scmp.eq.s32.totalorder %s15, 0
      %p35 = por %p33, %p34
      %p36 = scmp.ne.s32.totalorder %s25, %s28
      %p37 = scmp.eq.s32.totalorder %s20, 1
      %p38 = por %p36, %p37
      %p39 = scmp.ne.s32.totalorder %s28, %s29
      %p40 = scmp.eq.s32.totalorder %s20, 0
      %p41 = por %p39, %p40
      %p42 = scmp.ne.s32.totalorder %s28, %s29
      %p43 = scmp.eq.s32.totalorder %s21, 1
      %p44 = por %p42, %p43
      %p46 = scmp.ne.s32.totalorder %s29, %s45
      %p47 = scmp.eq.s32.totalorder %s21, 0
      %p48 = por %p46, %p47
      %s49 = ssub.s32 %s15, %s22
      %p50 = scmp.eq.s32.totalorder %s49, 0
      %s52 = sadd.s32 %s51, 1
      %s53 = scalar_select %p50, %s51, %s52
      %p56 = pneg %p50
      %p57 = scmp.eq.s32.totalorder %s15, 1
      %p58 = por %p56, %p57
      %p59 = scmp.ne.s32.totalorder %s51, %s54
      %p60 = scmp.eq.s32.totalorder %s15, 0
      %p61 = por %p59, %p60
      %p62 = scmp.ne.s32.totalorder %s51, %s54
      %p63 = scmp.eq.s32.totalorder %s20, 1
      %p64 = por %p62, %p63
      %p65 = scmp.ne.s32.totalorder %s54, %s55
      %p66 = scmp.eq.s32.totalorder %s20, 0
      %p67 = por %p65, %p66
      %p68 = scmp.ne.s32.totalorder %s54, %s55
      %p69 = scmp.eq.s32.totalorder %s21, 1
      %p70 = por %p68, %p69
      %p72 = scmp.ne.s32.totalorder %s55, %s71
      %p73 = scmp.eq.s32.totalorder %s21, 0
      %p74 = por %p72, %p73
      %s75 = ssub.s32 %s15, %s22
      %p76 = scmp.eq.s32.totalorder %s75, 0
      %s78 = sadd.s32 %s77, 1
      %s79 = scalar_select %p76, %s77, %s78
      %p82 = pneg %p76
      %p83 = scmp.eq.s32.totalorder %s15, 1
      %p84 = por %p82, %p83
      %p85 = scmp.ne.s32.totalorder %s77, %s80
      %p86 = scmp.eq.s32.totalorder %s15, 0
      %p87 = por %p85, %p86
      %p88 = scmp.ne.s32.totalorder %s77, %s80
      %p89 = scmp.eq.s32.totalorder %s20, 1
      %p90 = por %p88, %p89
      %p91 = scmp.ne.s32.totalorder %s80, %s81
      %p92 = scmp.eq.s32.totalorder %s20, 0
      %p93 = por %p91, %p92
      %p94 = scmp.ne.s32.totalorder %s80, %s81
      %p95 = scmp.eq.s32.totalorder %s21, 1
      %p96 = por %p94, %p95
      %p98 = scmp.ne.s32.totalorder %s81, %s97
      %p99 = scmp.eq.s32.totalorder %s21, 0
      %p100 = por %p98, %p99
      %p101 = scmp.le.s32.totalorder 1, %s15
      %p102 = scmp.lt.s32.totalorder %s15, 3
      %p103 = pnand %p101, %p102
      %p104 = pneg %p103
      // Predicated region
      $region9: #{focal_ctc_loss.1} parent=5 // pred_check
        _
      $region10: #{focal_ctc_loss.1} parent=5 // pred_check_branch
        %106 = sbr.rel (%p103) target = $region12
      $region11: #{focal_ctc_loss.1} parent=5 // pred_region
        %s107 = ssub.s32 %s15, 1
      $region12: #{focal_ctc_loss.1} parent=5 // pred_fallthru
        _
      %p108 = scmp.lt.s32.totalorder %s15, 2
      // Predicated region
      $region13: #{focal_ctc_loss.1} parent=5 // pred_check
        %p109 = pneg %p108
      $region14: #{focal_ctc_loss.1} parent=5 // pred_check_branch
        %111 = sbr.rel (%p109) target = $region16
      $region15: #{focal_ctc_loss.1} parent=5 // pred_region
        // Predicated region
        $region17: #{focal_ctc_loss.1} parent=15 // pred_check
          %p112 = pneg %p35
        $region18: #{focal_ctc_loss.1} parent=15 // pred_check_branch
          %114 = sbr.rel (%p112) target = $region20
        $region19: #{focal_ctc_loss.1} parent=15 // pred_region
          %s115 = sand.u32 %s25, 1
          %s116 = sand.u32 %s25, 1
          %s117 = smul.addr %s116, 128
          %s118 = scalar_lea.vmem [#allocation4], %s117
          %s119 = smul.addr %s15, 8
          %s120 = scalar_lea.vmem %s1, %s119
          // Predicated region
          $region21: #{focal_ctc_loss.1} parent=19 // pred_check
            _
          $region22: #{focal_ctc_loss.1} parent=19 // pred_check_branch
            %122 = sbr.rel (0) target = $region24
          $region23: #{focal_ctc_loss.1} parent=19 // pred_region
            // Predicated region
            $region25: #{focal_ctc_loss.1} parent=23 // pred_check
              _
            $region26: #{focal_ctc_loss.1} parent=23 // pred_check_branch
              %124 = sbr.rel (0) target = $region28
            $region27: #{focal_ctc_loss.1} parent=23 // pred_region
              // Predicated region
              $region40: #{focal_ctc_loss.1} parent=27 // pred_check
                _
              $region41: #{focal_ctc_loss.1} parent=27 // pred_check_branch
                %169 = sbr.rel (0) target = $region43
              $region42: #{focal_ctc_loss.1} parent=27 // pred_region
                loop: start=0, step=1, limit=1
                $region44: #{focal_ctc_loss.1} parent=42 // loop_pre_header
                  _
                $region45: #{focal_ctc_loss.1} parent=42 // loop_header
                  %s171 = sphi 0, %s175
                  %p172 = scmp.ge.s32.totalorder %s171, 1
                  %s176 = sphi %s120, %s120
                  %s177 = sphi %s118, %s118
                $region46: #{focal_ctc_loss.1} parent=42 // loop_header_branch
                  %174 = sbr.rel (%p172) target = $region50
                $region47: #{focal_ctc_loss.1} parent=42 // loop_body
                  %v178 = vld [vmem:[%s176] sm:$0xff]
                  %179 = vst [vmem:[%s177] sm:$0xff] %v178
                  %v180 = vld [vmem:[%s176 + $0x10] sm:$0xff]
                  %181 = vst [vmem:[%s177 + $0x8] sm:$0xff] %v180
                  %v182 = vld [vmem:[%s176 + $0x20] sm:$0xff]
                  %183 = vst [vmem:[%s177 + $0x10] sm:$0xff] %v182
                  %v184 = vld [vmem:[%s176 + $0x30] sm:$0xff]
                  %185 = vst [vmem:[%s177 + $0x18] sm:$0xff] %v184
                  %v186 = vld [vmem:[%s176 + $0x40] sm:$0xff]
                  %187 = vst [vmem:[%s177 + $0x20] sm:$0xff] %v186
                  %v188 = vld [vmem:[%s176 + $0x50] sm:$0xff]
                  %189 = vst [vmem:[%s177 + $0x28] sm:$0xff] %v188
                  %v190 = vld [vmem:[%s176 + $0x60] sm:$0xff]
                  %191 = vst [vmem:[%s177 + $0x30] sm:$0xff] %v190
                  %v192 = vld [vmem:[%s176 + $0x70] sm:$0xff]
                  %193 = vst [vmem:[%s177 + $0x38] sm:$0xff] %v192
                  %v194 = vld [vmem:[%s176 + $0x80] sm:$0xff]
                  %195 = vst [vmem:[%s177 + $0x40] sm:$0xff] %v194
                  %v196 = vld [vmem:[%s176 + $0x90] sm:$0xff]
                  %197 = vst [vmem:[%s177 + $0x48] sm:$0xff] %v196
                  %v198 = vld [vmem:[%s176 + $0xa0] sm:$0xff]
                  %199 = vst [vmem:[%s177 + $0x50] sm:$0xff] %v198
                  %v200 = vld [vmem:[%s176 + $0xb0] sm:$0xff]
                  %201 = vst [vmem:[%s177 + $0x58] sm:$0xff] %v200
                  %v202 = vld [vmem:[%s176 + $0xc0] sm:$0xff]
                  %203 = vst [vmem:[%s177 + $0x60] sm:$0xff] %v202
                  %v204 = vld [vmem:[%s176 + $0xd0] sm:$0xff]
                  %205 = vst [vmem:[%s177 + $0x68] sm:$0xff] %v204
                  %v206 = vld [vmem:[%s176 + $0xe0] sm:$0xff]
                  %207 = vst [vmem:[%s177 + $0x70] sm:$0xff] %v206
                  %v208 = vld [vmem:[%s176 + $0xf0] sm:$0xff]
                  %209 = vst [vmem:[%s177 + $0x78] sm:$0xff] %v208
                $region48: #{focal_ctc_loss.1} parent=42 // loop_footer
                  %s175 = sadd.s32 1, %s171
                $region49: #{focal_ctc_loss.1} parent=42 // loop_footer_branch
                  %170 = sbr.rel target = $region45
                $region50: #{focal_ctc_loss.1} parent=42 // loop_exit
                  _
              $region43: #{focal_ctc_loss.1} parent=27 // pred_fallthru
                _
              // Predicated region
              $region51: #{focal_ctc_loss.1} parent=27 // pred_check
                _
              $region52: #{focal_ctc_loss.1} parent=27 // pred_check_branch
                %211 = sbr.rel target = $region54
              $region53: #{focal_ctc_loss.1} parent=27 // pred_region
                _
              $region54: #{focal_ctc_loss.1} parent=27 // pred_fallthru
                _
            $region28: #{focal_ctc_loss.1} parent=23 // pred_fallthru
              _
            // Predicated region
            $region29: #{focal_ctc_loss.1} parent=23 // pred_check
              _
            $region30: #{focal_ctc_loss.1} parent=23 // pred_check_branch
              %126 = sbr.rel target = $region32
            $region31: #{focal_ctc_loss.1} parent=23 // pred_region
              loop: start=0, step=1, limit=1
              $region33: #{focal_ctc_loss.1} parent=31 // loop_pre_header
                _
              $region34: #{focal_ctc_loss.1} parent=31 // loop_header
                %s129 = sphi 0, %s133
                %p130 = scmp.ge.s32.totalorder %s129, 1
                %s134 = sphi %s120, %s120
                %s135 = sphi %s118, %s118
              $region35: #{focal_ctc_loss.1} parent=31 // loop_header_branch
                %132 = sbr.rel (%p130) target = $region39
              $region36: #{focal_ctc_loss.1} parent=31 // loop_body
                %v136 = vld [vmem:[%s134] sm:$0xff]
                %137 = vst [vmem:[%s135] sm:$0xff] %v136
                %v138 = vld [vmem:[%s134 + $0x10] sm:$0xff]
                %139 = vst [vmem:[%s135 + $0x8] sm:$0xff] %v138
                %v140 = vld [vmem:[%s134 + $0x20] sm:$0xff]
                %141 = vst [vmem:[%s135 + $0x10] sm:$0xff] %v140
                %v142 = vld [vmem:[%s134 + $0x30] sm:$0xff]
                %143 = vst [vmem:[%s135 + $0x18] sm:$0xff] %v142
                %v144 = vld [vmem:[%s134 + $0x40] sm:$0xff]
                %145 = vst [vmem:[%s135 + $0x20] sm:$0xff] %v144
                %v146 = vld [vmem:[%s134 + $0x50] sm:$0xff]
                %147 = vst [vmem:[%s135 + $0x28] sm:$0xff] %v146
                %v148 = vld [vmem:[%s134 + $0x60] sm:$0xff]
                %149 = vst [vmem:[%s135 + $0x30] sm:$0xff] %v148
                %v150 = vld [vmem:[%s134 + $0x70] sm:$0xff]
                %151 = vst [vmem:[%s135 + $0x38] sm:$0xff] %v150
                %v152 = vld [vmem:[%s134 + $0x80] sm:$0xff]
                %153 = vst [vmem:[%s135 + $0x40] sm:$0xff] %v152
                %v154 = vld [vmem:[%s134 + $0x90] sm:$0xff]
                %155 = vst [vmem:[%s135 + $0x48] sm:$0xff] %v154
                %v156 = vld [vmem:[%s134 + $0xa0] sm:$0xff]
                %157 = vst [vmem:[%s135 + $0x50] sm:$0xff] %v156
                %v158 = vld [vmem:[%s134 + $0xb0] sm:$0xff]
                %159 = vst [vmem:[%s135 + $0x58] sm:$0xff] %v158
                %v160 = vld [vmem:[%s134 + $0xc0] sm:$0xff]
                %161 = vst [vmem:[%s135 + $0x60] sm:$0xff] %v160
                %v162 = vld [vmem:[%s134 + $0xd0] sm:$0xff]
                %163 = vst [vmem:[%s135 + $0x68] sm:$0xff] %v162
                %v164 = vld [vmem:[%s134 + $0xe0] sm:$0xff]
                %165 = vst [vmem:[%s135 + $0x70] sm:$0xff] %v164
                %v166 = vld [vmem:[%s134 + $0xf0] sm:$0xff]
                %167 = vst [vmem:[%s135 + $0x78] sm:$0xff] %v166
              $region37: #{focal_ctc_loss.1} parent=31 // loop_footer
                %s133 = sadd.s32 1, %s129
              $region38: #{focal_ctc_loss.1} parent=31 // loop_footer_branch
                %128 = sbr.rel target = $region34
              $region39: #{focal_ctc_loss.1} parent=31 // loop_exit
                _
            $region32: #{focal_ctc_loss.1} parent=23 // pred_fallthru
              _
          $region24: #{focal_ctc_loss.1} parent=19 // pred_fallthru
            _
          %212 = vnop
        $region20: #{focal_ctc_loss.1} parent=15 // pred_fallthru
          _
        // Predicated region
        $region55: #{focal_ctc_loss.1} parent=15 // pred_check
          %p213 = pneg %p61
        $region56: #{focal_ctc_loss.1} parent=15 // pred_check_branch
          %215 = sbr.rel (%p213) target = $region58
        $region57: #{focal_ctc_loss.1} parent=15 // pred_region
          %s216 = sand.u32 %s51, 1
          %s217 = sand.u32 %s51, 1
          %s218 = smul.addr %s217, 24
          %s219 = scalar_lea.vmem [#allocation5], %s218
          %s220 = smul.addr %s15, 8
          %s221 = scalar_lea.vmem %s2, %s220
          // Predicated region
          $region59: #{focal_ctc_loss.1} parent=57 // pred_check
            _
          $region60: #{focal_ctc_loss.1} parent=57 // pred_check_branch
            %223 = sbr.rel (0) target = $region62
          $region61: #{focal_ctc_loss.1} parent=57 // pred_region
            // Predicated region
            $region63: #{focal_ctc_loss.1} parent=61 // pred_check
              _
            $region64: #{focal_ctc_loss.1} parent=61 // pred_check_branch
              %225 = sbr.rel (0) target = $region66
            $region65: #{focal_ctc_loss.1} parent=61 // pred_region
              // Predicated region
              $region78: #{focal_ctc_loss.1} parent=65 // pred_check
                _
              $region79: #{focal_ctc_loss.1} parent=65 // pred_check_branch
                %244 = sbr.rel (0) target = $region81
              $region80: #{focal_ctc_loss.1} parent=65 // pred_region
                loop: start=0, step=1, limit=1
                $region82: #{focal_ctc_loss.1} parent=80 // loop_pre_header
                  _
                $region83: #{focal_ctc_loss.1} parent=80 // loop_header
                  %s246 = sphi 0, %s250
                  %p247 = scmp.ge.s32.totalorder %s246, 1
                  %s251 = sphi %s221, %s221
                  %s252 = sphi %s219, %s219
                $region84: #{focal_ctc_loss.1} parent=80 // loop_header_branch
                  %249 = sbr.rel (%p247) target = $region88
                $region85: #{focal_ctc_loss.1} parent=80 // loop_body
                  %v253 = vld [vmem:[%s251] sm:$0xff]
                  %254 = vst [vmem:[%s252] sm:$0xff] %v253
                  %v255 = vld [vmem:[%s251 + $0x10] sm:$0xff]
                  %256 = vst [vmem:[%s252 + $0x8] sm:$0xff] %v255
                  %v257 = vld [vmem:[%s251 + $0x20] sm:$0xff]
                  %258 = vst [vmem:[%s252 + $0x10] sm:$0xff] %v257
                $region86: #{focal_ctc_loss.1} parent=80 // loop_footer
                  %s250 = sadd.s32 1, %s246
                $region87: #{focal_ctc_loss.1} parent=80 // loop_footer_branch
                  %245 = sbr.rel target = $region83
                $region88: #{focal_ctc_loss.1} parent=80 // loop_exit
                  _
              $region81: #{focal_ctc_loss.1} parent=65 // pred_fallthru
                _
              // Predicated region
              $region89: #{focal_ctc_loss.1} parent=65 // pred_check
                _
              $region90: #{focal_ctc_loss.1} parent=65 // pred_check_branch
                %260 = sbr.rel target = $region92
              $region91: #{focal_ctc_loss.1} parent=65 // pred_region
                _
              $region92: #{focal_ctc_loss.1} parent=65 // pred_fallthru
                _
            $region66: #{focal_ctc_loss.1} parent=61 // pred_fallthru
              _
            // Predicated region
            $region67: #{focal_ctc_loss.1} parent=61 // pred_check
              _
            $region68: #{focal_ctc_loss.1} parent=61 // pred_check_branch
              %227 = sbr.rel target = $region70
            $region69: #{focal_ctc_loss.1} parent=61 // pred_region
              loop: start=0, step=1, limit=1
              $region71: #{focal_ctc_loss.1} parent=69 // loop_pre_header
                _
              $region72: #{focal_ctc_loss.1} parent=69 // loop_header
                %s230 = sphi 0, %s234
                %p231 = scmp.ge.s32.totalorder %s230, 1
                %s235 = sphi %s221, %s221
                %s236 = sphi %s219, %s219
              $region73: #{focal_ctc_loss.1} parent=69 // loop_header_branch
                %233 = sbr.rel (%p231) target = $region77
              $region74: #{focal_ctc_loss.1} parent=69 // loop_body
                %v237 = vld [vmem:[%s235] sm:$0xff]
                %238 = vst [vmem:[%s236] sm:$0xff] %v237
                %v239 = vld [vmem:[%s235 + $0x10] sm:$0xff]
                %240 = vst [vmem:[%s236 + $0x8] sm:$0xff] %v239
                %v241 = vld [vmem:[%s235 + $0x20] sm:$0xff]
                %242 = vst [vmem:[%s236 + $0x10] sm:$0xff] %v241
              $region75: #{focal_ctc_loss.1} parent=69 // loop_footer
                %s234 = sadd.s32 1, %s230
              $region76: #{focal_ctc_loss.1} parent=69 // loop_footer_branch
                %229 = sbr.rel target = $region72
              $region77: #{focal_ctc_loss.1} parent=69 // loop_exit
                _
            $region70: #{focal_ctc_loss.1} parent=61 // pred_fallthru
              _
          $region62: #{focal_ctc_loss.1} parent=57 // pred_fallthru
            _
          %261 = vnop
        $region58: #{focal_ctc_loss.1} parent=15 // pred_fallthru
          _
      $region16: #{focal_ctc_loss.1} parent=5 // pred_fallthru
        _
      %p262 = scmp.le.s32.totalorder 1, %s15
      %p263 = scmp.lt.s32.totalorder %s15, 3
      %p264 = pnand %p262, %p263
      %p265 = pneg %p264
      // Predicated region
      $region93: #{focal_ctc_loss.1} parent=5 // pred_check
        _
      $region94: #{focal_ctc_loss.1} parent=5 // pred_check_branch
        %267 = sbr.rel (%p264) target = $region96
      $region95: #{focal_ctc_loss.1} parent=5 // pred_region
        %s268 = ssub.s32 %s15, 1
        %s269 = sand.u32 %s28, 1
        %s270 = sand.u32 %s28, 1
        %s271 = smul.addr %s270, 128
        %s272 = scalar_lea.vmem [#allocation4], %s271
        // Predicated region
        $region97: #{focal_ctc_loss.1} parent=95 // pred_check
          %p273 = pneg %p41
        $region98: #{focal_ctc_loss.1} parent=95 // pred_check_branch
          %275 = sbr.rel (%p273) target = $region100
        $region99: #{focal_ctc_loss.1} parent=95 // pred_region
          _
        $region100: #{focal_ctc_loss.1} parent=95 // pred_fallthru
          _
        %s276 = sand.u32 %s54, 1
        %s277 = sand.u32 %s54, 1
        %s278 = smul.addr %s277, 24
        %s279 = scalar_lea.vmem [#allocation5], %s278
        // Predicated region
        $region101: #{focal_ctc_loss.1} parent=95 // pred_check
          %p280 = pneg %p67
        $region102: #{focal_ctc_loss.1} parent=95 // pred_check_branch
          %282 = sbr.rel (%p280) target = $region104
        $region103: #{focal_ctc_loss.1} parent=95 // pred_region
          _
        $region104: #{focal_ctc_loss.1} parent=95 // pred_fallthru
          _
        %s283 = sand.u32 %s28, 1
        %s284 = sand.u32 %s28, 1
        %s285 = smul.addr %s284, 128
        %s286 = scalar_lea.vmem [#allocation4], %s285
        %p287 = pneg %p41
        %p288 = pneg %p38
        %s289 = sand.u32 %s54, 1
        %s290 = sand.u32 %s54, 1
        %s291 = smul.addr %s290, 24
        %s292 = scalar_lea.vmem [#allocation5], %s291
        %p293 = pneg %p67
        %p294 = pneg %p64
        %p295 = pneg %p93
        %p296 = pneg %p90
        %p297 = scmp.lt.s32.totalorder %s20, 1
        %s298 = scalar_select %p297, %s20, 1
        %s299 = smul.addr %s298, 8
        %s300 = scalar_lea.vmem %s3, %s299
        %p301 = scmp.lt.s32.totalorder %s20, 1
        %s302 = scalar_select %p301, %s20, 1
        %s303 = smul.addr %s302, 8
        %s304 = scalar_lea.vmem %s3, %s303
        %v305 = vld [vmem:[%s279] sm:$0xff]
        %s306 = scalar_lea.vmem %s279, 8 [#allocation5]
        %v307 = vld [vmem:[%s306] sm:$0xff]
        %s308 = scalar_lea.vmem %s279, 16 [#allocation5]
        %v309 = vld [vmem:[%s308] sm:$0xff]
        %v310 = vlaneseq
        %v311 = vand.u32 %v310, 127
        %vm312 = vcmp.ge.s32.totalorder %v311, 1
        %vm313 = vcmp.lt.s32.totalorder %v311, 2
        %v314 = vld [vmem:[%s272] sm:$0xff]
        %v315 = vsel %vm313, %v314, -1e+30
        %s316 = sld [smem:[#allocation3 + %s20]]
        // While loop
        $region105: #{focal_ctc_loss.1} parent=95 // loop_pre_header
          _
        $region106: #{focal_ctc_loss.1} parent=95 // loop_header
          %s318 = sphi 1, %s320
          %p319 = scmp.ge.s32.totalorder %s318, %s316
          %v323 = vphi %v315, %v353
        $region107: #{focal_ctc_loss.1} parent=95 // loop_header_branch
          %322 = sbr.rel (%p319) target = $region111
        $region108: #{focal_ctc_loss.1} parent=95 // loop_body
          %s324 = smul.u32 %s318, 8
          %s325 = scalar_lea.vmem %s272, %s324 [#allocation4]
          %v326 = vld [vmem:[%s325] sm:$0xff]
          %327 = vrot.lane.b32.xlu0 %v323, 1
          %v328 = vpop.permute.xlu0 %327
          %v329 = vsel %vm312, %v328, -1e+30
          %330 = vrot.lane.b32.xlu0 %v323, 2
          %v331 = vpop.permute.xlu0 %330
          %v332 = vadd.f32 %v331, %v305
          %v333 = vmax.f32 %v329, %v332
          %v334 = vmax.f32 %v323, %v333
          %v335 = vsub.f32 %v323, %v334
          %v336 = vmul.f32 %v335, 1.442695
          %v337 = vpow.pop %v336
          %v338 = vsub.f32 %v329, %v334
          %v339 = vmul.f32 %v338, 1.442695
          %v340 = vpow.pop %v339
          %v341 = vadd.f32 %v337, %v340
          %v342 = vsub.f32 %v332, %v334
          %v343 = vmul.f32 %v342, 1.442695
          %v344 = vpow.pop %v343
          %v345 = vadd.f32 %v341, %v344
          %v346 = vlog2.pop %v345
          %v347 = vmul.f32 %v346, 0.6931472
          %v348 = vadd.f32 %v334, %v347
          %v349 = vadd.f32 %v348, %v326
          %s350 = scvt.s32.f32 %s318
          %v351 = vstv %s350
          %vm352 = vcmp.lt.f32.partialorder %v351, %v309
          %v353 = vsel %vm352, %v349, %v323
        $region109: #{focal_ctc_loss.1} parent=95 // loop_footer
          %s320 = sadd.s32 %s318, 1
        $region110: #{focal_ctc_loss.1} parent=95 // loop_footer_branch
          %317 = sbr.rel target = $region106
        $region111: #{focal_ctc_loss.1} parent=95 // loop_exit
          _
        %v354 = vadd.f32 %v323, %v307
        %355 = vmax.xlane.f32.xlu0 %v354
        %v356 = vpop.xlane.xlu0 %355
        %v357 = vsub.f32 %v354, %v356
        %v358 = vmul.f32 %v357, 1.442695
        %v359 = vpow.pop %v358
        %360 = vadd.xlane.f32.xlu0 %v359
        %v361 = vpop.xlane.xlu0 %360
        %v362 = vlog2.pop %v361
        %v363 = vmul.f32 %v362, 0.6931472
        %v364 = vadd.f32 %v356, %v363
        %v365 = vsub.f32 0.0, %v364
        %v366 = vsub.f32 0.0, %v365
        %v367 = vmul.f32 %v366, 1.442695
        %v368 = vpow.pop %v367
        %v369 = vsub.f32 1.0, %v368
        %v370 = vmax.f32 %v369, 0.0
        %v371 = vmul.f32 %v370, %v370
        %v372 = vmul.f32 %v371, %v365
        %vm373 = vcmask 7168
        %374 = vst.msk [vmem:[%s304] sm:$0xff] %vm373, %v372
        %p375 = scmp.lt.s32.totalorder %s20, 1
        %s376 = scalar_select %p375, %s20, 1
        %s377 = smul.addr %s376, 8
        %s378 = scalar_lea.vmem %s3, %s377
        // Predicated region
        $region112: #{focal_ctc_loss.1} parent=95 // pred_check
          %p379 = pneg %p90
        $region113: #{focal_ctc_loss.1} parent=95 // pred_check_branch
          %381 = sbr.rel (%p379) target = $region115
        $region114: #{focal_ctc_loss.1} parent=95 // pred_region
          _
        $region115: #{focal_ctc_loss.1} parent=95 // pred_fallthru
          _
      $region96: #{focal_ctc_loss.1} parent=5 // pred_fallthru
        _
      %p382 = scmp.le.s32.totalorder 2, %s15
      // Predicated region
      $region116: #{focal_ctc_loss.1} parent=5 // pred_check
        %p383 = pneg %p382
      $region117: #{focal_ctc_loss.1} parent=5 // pred_check_branch
        %385 = sbr.rel (%p383) target = $region119
      $region118: #{focal_ctc_loss.1} parent=5 // pred_region
        %s386 = ssub.s32 %s15, 2
        // Predicated region
        $region120: #{focal_ctc_loss.1} parent=118 // pred_check
          %p387 = pneg %p96
        $region121: #{focal_ctc_loss.1} parent=118 // pred_check_branch
          %389 = sbr.rel (%p387) target = $region123
        $region122: #{focal_ctc_loss.1} parent=118 // pred_region
          %p390 = scmp.lt.s32.totalorder %s21, 1
          %s391 = scalar_select %p390, %s21, 1
          %s392 = smul.addr %s391, 8
          %s393 = scalar_lea.vmem %s3, %s392
        $region123: #{focal_ctc_loss.1} parent=118 // pred_fallthru
          _
      $region119: #{focal_ctc_loss.1} parent=5 // pred_fallthru
        _
    $region6: #{focal_ctc_loss.1} parent=1 // loop_footer
      %s19 = sadd.s32 1, %s15
    $region7: #{focal_ctc_loss.1} parent=1 // loop_footer_branch
      %14 = sbr.rel target = $region3
    $region8: #{focal_ctc_loss.1} parent=1 // loop_exit
      _

</llo_original>
